<compile_context>
chip_gen: v7x
topology: tpu7x:2x2x1
jax: 0.10.0
libtpu: 0.0.40
codegen_flags: <defaults>
</compile_context>

<pallas_src>
import jax
import jax.numpy as jnp
from jax.experimental import pallas as pl
from jax.experimental.pallas import tpu as pltpu

_LANE = 128
_SUBLANE = 8
# Per-block byte budget (per live buffer). 3 MiB -> ~12 MiB with double-buffered
# in+out: fits every TPU generation's default scoped VMEM (v5e 16 MiB).
_BLOCK_BYTES = 3 * 1024 * 1024


def _round_up(x: int, m: int) -> int:
    return ((x + m - 1) // m) * m


def _ycbcr_to_rgb_kernel(x_ref, o_ref):
    # x_ref / o_ref : (b_tile, 3, r_tile, lanes) tiles in VMEM.
    # Per-channel slabs are (b_tile, r_tile, lanes) -> dense (8,128) vregs.
    y = x_ref[:, 0, :, :].astype(jnp.float32)
    cb = x_ref[:, 1, :, :].astype(jnp.float32) - 0.5
    cr = x_ref[:, 2, :, :].astype(jnp.float32) - 0.5

    o_ref[:, 0, :, :] = (y + 1.403 * cr).astype(o_ref.dtype)
    o_ref[:, 1, :, :] = (y - 0.714 * cr - 0.344 * cb).astype(o_ref.dtype)
    o_ref[:, 2, :, :] = (y + 1.773 * cb).astype(o_ref.dtype)


def ycbcr_to_rgb(image: jax.Array, *, block_bytes: int = _BLOCK_BYTES) -> jax.Array:
    """YCbCr -> RGB, image shape (*, 3, H, W), values assumed in (0, 1)."""
    if image.ndim < 3 or image.shape[-3] != 3:
        raise ValueError(
            "Input size must have a shape of (*, 3, H, W). Got {}".format(image.shape)
        )

    lead = image.shape[:-3]
    H, W = image.shape[-2], image.shape[-1]
    N = H * W
    B = 1
    for d in lead:
        B *= d
    itemsize = jnp.dtype(image.dtype).itemsize

    # Choose the (rows, lanes) view of the per-channel spatial data.
    if N % _LANE == 0:
        # Free (contiguity-preserving) reshape to a lane-dense layout.
        rows, lanes = N // _LANE, _LANE
    else:
        # Ragged W: keep native layout, full-W lane dim, tile over H.
        rows, lanes = H, W
    x = image.reshape((B, 3, rows, lanes))

    # Row tile: multiple of 8 (or the full row extent), capped by the block
    # byte budget (accounting for lane padding in VMEM).
    lane_pad = _round_up(lanes, _LANE)
    max_rows = max(_SUBLANE,
                   (block_bytes // (3 * lane_pad * itemsize)) // _SUBLANE * _SUBLANE)
    if rows <= max_rows:
        r_tile = rows              # full extent: always a legal block dim
    else:
        r_tile = max_rows          # multiple of 8; Pallas masks the tail block
    n_row_tiles = pl.cdiv(rows, r_tile)

    # Batch tile: when a whole image fits in one row tile, pack several images
    # per grid step so per-step DMA is non-trivial, but keep enough parallel
    # steps (>= ~4 when B allows) so both v7x TensorCores stay busy.
    b_tile = 1
    if n_row_tiles == 1 and B > 1:
        per_image_bytes = 3 * _round_up(rows, _SUBLANE) * lane_pad * itemsize
        by_budget = max(1, block_bytes // max(1, per_image_bytes))
        by_parallel = max(1, B // 4)
        b_tile = max(1, min(B, by_budget, by_parallel))
        while B % b_tile:          # keep the grid exact on the batch axis
            b_tile -= 1

    grid = (B // b_tile, n_row_tiles)

    cost = pl.CostEstimate(
        flops=10 * B * N,
        transcendentals=0,
        bytes_accessed=2 * 3 * B * N * itemsize,
    )

    block = (b_tile, 3, r_tile, lanes)
    out = pl.pallas_call(
        _ycbcr_to_rgb_kernel,
        out_shape=jax.ShapeDtypeStruct((B, 3, rows, lanes), image.dtype),
        grid=grid,
        in_specs=[pl.BlockSpec(block, lambda b, r: (b, 0, r, 0))],
        out_specs=pl.BlockSpec(block, lambda b, r: (b, 0, r, 0)),
        compiler_params=pltpu.CompilerParams(
            dimension_semantics=("parallel", "parallel"),
        ),
        cost_estimate=cost,
    )(x)

    return out.reshape(lead + (3, H, W))


class YcbcrToRgb:
    """Pallas equivalent of the PyTorch YcbcrToRgb module (no parameters)."""

    def __call__(self, image: jax.Array) -> jax.Array:
        return ycbcr_to_rgb(image)


def _reference(image: jax.Array) -> jax.Array:
    y = image[..., 0, :, :].astype(jnp.float32)
    cb = image[..., 1, :, :].astype(jnp.float32)
    cr = image[..., 2, :, :].astype(jnp.float32)
    delta = 0.5
    cb_s = cb - delta
    cr_s = cr - delta
    r = y + 1.403 * cr_s
    g = y - 0.714 * cr_s - 0.344 * cb_s
    b = y + 1.773 * cb_s
    return jnp.stack([r, g, b], axis=-3).astype(image.dtype)


if __name__ == "__main__":
    mod = YcbcrToRgb()

    # Main test: (2, 3, 16, 16) f32 (H*W = 256, lane-dense fast path).
    x = jax.random.uniform(jax.random.PRNGKey(0), (2, 3, 16, 16), dtype=jnp.float32)
    out = jax.block_until_ready(mod(x))
    ref = _reference(x)
    assert out.shape == x.shape and out.dtype == x.dtype
    assert jnp.allclose(out, ref, atol=1e-6, rtol=1e-6)

    # Ragged spatial test: (2, 3, 4, 5) exercises the full-extent (H, W) block
    # path (no pad / slice passes).
    x2 = jax.random.uniform(jax.random.PRNGKey(1), (2, 3, 4, 5), dtype=jnp.float32)
    out2 = jax.block_until_ready(mod(x2))
    assert out2.shape == x2.shape
    assert jnp.allclose(out2, _reference(x2), atol=1e-6, rtol=1e-6)

    # Row-tiling + masked tail-block test: rows = 20, tile of 8 rows -> 3 row
    # tiles with a ragged tail (forced via a tiny block budget).
    x3 = jax.random.uniform(jax.random.PRNGKey(2), (1, 3, 20, 128), dtype=jnp.float32)
    out3 = jax.block_until_ready(
        ycbcr_to_rgb(x3, block_bytes=3 * 8 * 128 * 4))
    assert out3.shape == x3.shape
    assert jnp.allclose(out3, _reference(x3), atol=1e-6, rtol=1e-6)

    # Batch-blocking test: many small images packed several-per-block.
    x4 = jax.random.uniform(jax.random.PRNGKey(3), (8, 3, 16, 16), dtype=jnp.float32)
    out4 = jax.block_until_ready(mod(x4))
    assert out4.shape == x4.shape
    assert jnp.allclose(out4, _reference(x4), atol=1e-6, rtol=1e-6)

    # bf16 test (f32 math inside the kernel, cast on store).
    x5 = jax.random.uniform(jax.random.PRNGKey(4), (2, 3, 16, 16), dtype=jnp.bfloat16)
    out5 = jax.block_until_ready(mod(x5))
    assert out5.dtype == jnp.bfloat16
    assert jnp.allclose(out5.astype(jnp.float32),
                        _reference(x5).astype(jnp.float32), atol=2e-2, rtol=2e-2)

    print("KERNEL_OK")
</pallas_src>

<mosaic_0001>
module attributes {stable_mosaic.version = 11 : i64} {
  func.func @_ycbcr_to_rgb_kernel(%arg0: i32, %arg1: i32, %arg2: memref<1x3x2x128xf32, #tpu.memory_space<vmem>>, %arg3: memref<1x3x2x128xf32, #tpu.memory_space<vmem>>) attributes {dimension_semantics = [#tpu.dimension_semantics<parallel>, #tpu.dimension_semantics<parallel>], iteration_bounds = array<i64: 2, 1>, scalar_prefetch = 0 : i64, scratch_operands = 0 : i64, tpu.core_type = #tpu.core_type<tc>, window_params = [{transform_indices = @transform_0, window_bounds = array<i64: 1, 3, 2, 128>}, {transform_indices = @transform_1, window_bounds = array<i64: 1, 3, 2, 128>}]} {
    %c0 = arith.constant 0 : index
    %c0_0 = arith.constant 0 : index
    %c0_1 = arith.constant 0 : index
    %c0_2 = arith.constant 0 : index
    %0 = vector.load %arg2[%c0, %c0_0, %c0_1, %c0_2] : memref<1x3x2x128xf32, #tpu.memory_space<vmem>>, vector<1x1x2x128xf32>
    %1 = vector.shape_cast %0 : vector<1x1x2x128xf32> to vector<1x2x128xf32>
    %c0_3 = arith.constant 0 : index
    %c1 = arith.constant 1 : index
    %c0_4 = arith.constant 0 : index
    %c0_5 = arith.constant 0 : index
    %2 = vector.load %arg2[%c0_3, %c1, %c0_4, %c0_5] : memref<1x3x2x128xf32, #tpu.memory_space<vmem>>, vector<1x1x2x128xf32>
    %3 = vector.shape_cast %2 : vector<1x1x2x128xf32> to vector<1x2x128xf32>
    %cst = arith.constant 5.000000e-01 : f32
    %4 = vector.broadcast %cst : f32 to vector<1x2x128xf32>
    %5 = arith.subf %3, %4 : vector<1x2x128xf32>
    %c0_6 = arith.constant 0 : index
    %c2 = arith.constant 2 : index
    %c0_7 = arith.constant 0 : index
    %c0_8 = arith.constant 0 : index
    %6 = vector.load %arg2[%c0_6, %c2, %c0_7, %c0_8] : memref<1x3x2x128xf32, #tpu.memory_space<vmem>>, vector<1x1x2x128xf32>
    %7 = vector.shape_cast %6 : vector<1x1x2x128xf32> to vector<1x2x128xf32>
    %cst_9 = arith.constant 5.000000e-01 : f32
    %8 = vector.broadcast %cst_9 : f32 to vector<1x2x128xf32>
    %9 = arith.subf %7, %8 : vector<1x2x128xf32>
    %cst_10 = arith.constant 1.403000e+00 : f32
    %10 = vector.broadcast %cst_10 : f32 to vector<1x2x128xf32>
    %11 = arith.mulf %10, %9 : vector<1x2x128xf32>
    %12 = arith.addf %1, %11 : vector<1x2x128xf32>
    %c0_11 = arith.constant 0 : index
    %c0_12 = arith.constant 0 : index
    %c0_13 = arith.constant 0 : index
    %c0_14 = arith.constant 0 : index
    %13 = vector.load %arg3[%c0_11, %c0_12, %c0_13, %c0_14] : memref<1x3x2x128xf32, #tpu.memory_space<vmem>>, vector<1x1x2x128xf32>
    %14 = vector.shape_cast %13 : vector<1x1x2x128xf32> to vector<1x2x128xf32>
    %15 = vector.shape_cast %12 : vector<1x2x128xf32> to vector<1x1x2x128xf32>
    tpu.vector_store %arg3[%c0_11, %c0_12, %c0_13, %c0_14], %15 {strides = array<i32>} : memref<1x3x2x128xf32, #tpu.memory_space<vmem>>, vector<1x1x2x128xf32>,
    %cst_15 = arith.constant 7.140000e-01 : f32
    %16 = vector.broadcast %cst_15 : f32 to vector<1x2x128xf32>
    %17 = arith.mulf %16, %9 : vector<1x2x128xf32>
    %18 = arith.subf %1, %17 : vector<1x2x128xf32>
    %cst_16 = arith.constant 3.440000e-01 : f32
    %19 = vector.broadcast %cst_16 : f32 to vector<1x2x128xf32>
    %20 = arith.mulf %19, %5 : vector<1x2x128xf32>
    %21 = arith.subf %18, %20 : vector<1x2x128xf32>
    %c0_17 = arith.constant 0 : index
    %c1_18 = arith.constant 1 : index
    %c0_19 = arith.constant 0 : index
    %c0_20 = arith.constant 0 : index
    %22 = vector.load %arg3[%c0_17, %c1_18, %c0_19, %c0_20] : memref<1x3x2x128xf32, #tpu.memory_space<vmem>>, vector<1x1x2x128xf32>
    %23 = vector.shape_cast %22 : vector<1x1x2x128xf32> to vector<1x2x128xf32>
    %24 = vector.shape_cast %21 : vector<1x2x128xf32> to vector<1x1x2x128xf32>
    tpu.vector_store %arg3[%c0_17, %c1_18, %c0_19, %c0_20], %24 {strides = array<i32>} : memref<1x3x2x128xf32, #tpu.memory_space<vmem>>, vector<1x1x2x128xf32>,
    %cst_21 = arith.constant 1.773000e+00 : f32
    %25 = vector.broadcast %cst_21 : f32 to vector<1x2x128xf32>
    %26 = arith.mulf %25, %5 : vector<1x2x128xf32>
    %27 = arith.addf %1, %26 : vector<1x2x128xf32>
    %c0_22 = arith.constant 0 : index
    %c2_23 = arith.constant 2 : index
    %c0_24 = arith.constant 0 : index
    %c0_25 = arith.constant 0 : index
    %28 = vector.load %arg3[%c0_22, %c2_23, %c0_24, %c0_25] : memref<1x3x2x128xf32, #tpu.memory_space<vmem>>, vector<1x1x2x128xf32>
    %29 = vector.shape_cast %28 : vector<1x1x2x128xf32> to vector<1x2x128xf32>
    %30 = vector.shape_cast %27 : vector<1x2x128xf32> to vector<1x1x2x128xf32>
    tpu.vector_store %arg3[%c0_22, %c2_23, %c0_24, %c0_25], %30 {strides = array<i32>} : memref<1x3x2x128xf32, #tpu.memory_space<vmem>>, vector<1x1x2x128xf32>,
    return
  }
  func.func @transform_0(%arg0: i32, %arg1: i32) -> (i32, i32, i32, i32) {
    %c0_i32 = arith.constant 0 : i32
    %c0_i32_0 = arith.constant 0 : i32
    %c0_i32_1 = arith.constant 0 : i32
    return %arg0, %c0_i32, %arg1, %c0_i32_0 : i32, i32, i32, i32
  }
  func.func @transform_1(%arg0: i32, %arg1: i32) -> (i32, i32, i32, i32) {
    %c0_i32 = arith.constant 0 : i32
    %c0_i32_0 = arith.constant 0 : i32
    %c0_i32_1 = arith.constant 0 : i32
    return %arg0, %c0_i32, %arg1, %c0_i32_0 : i32, i32, i32, i32
  }
}

</mosaic_0001>

<llo_original>
// kernel: tpu_custom_call.1
$region0: #{tpu_custom_call.1}
  #allocation0 [shape = 'u32[]', space=smem, size = 0x4, offset = 0x4, fixed_abs, tag = 'smem constant byte address 0x4 - core index']
  #allocation1 [shape = 'u32[144,128]{1,0:T(1,128)}', space=vmem, size = 0x12000, scoped, tag = 'internal scratch']
  %s0 = inlined_call_operand.hbm [shape: f32[2,3,2,128], index: 0, kind: input, shape index: {}]
  %s1 = inlined_call_operand.hbm [shape: f32[2,3,2,128], index: 1, kind: output, shape index: {}]
  %s2 = sld [smem:[#allocation0]]
  $region41: #{tpu_custom_call.1} parent=0
    _
  %s4 = ssub.s32 1, %s2
  %s5 = scalar_select 0, %s4, %s2
  $region1: #{tpu_custom_call.1} parent=0
    #allocation2 [shape = 'u8[6144]{0}', space=vmem, size = 0x1800, scoped, tag = 'input window, operand 0']
    #allocation3 [shape = 's32[2]{0}', space=sflag, size = 0x8, scoped, tag = 'scoped memory for tpu_custom_call.1']
    #allocation4 [shape = 's32[2]{0}', space=sflag, size = 0x8, scoped, tag = 'scoped memory for tpu_custom_call.1']
    #allocation5 [shape = 'u8[6144]{0}', space=vmem, size = 0x1800, scoped, tag = 'output window, operand 0']
    %6 = vsyncpa [#allocation3], 0
    %s7 = scalar_lea.sflag [#allocation3], 1
    %8 = vsyncpa %s7, 0
    %9 = vsyncpa [#allocation4], 0
    %s10 = scalar_lea.sflag [#allocation4], 1
    %11 = vsyncpa %s10, 0
    loop: start=0, step=1, limit=4
    $region2: #{tpu_custom_call.1} parent=1 // loop_pre_header
      _
    $region3: #{tpu_custom_call.1} parent=1 // loop_header
      %s13 = sphi 0, %s17
      %p14 = scmp.ge.s32.totalorder %s13, 4
      %s20 = sphi 0, %s32
      %s21 = sphi 0, %s28
      %s22 = sphi 0, %s20
      %s23 = sphi 0, %s21
      %s24 = sphi 0, %s22
      %s25 = sphi 0, %s23
      %s37 = sphi 0, %s39
      %s40 = sphi 0, %s37
      %s41 = sphi 0, %s40
      %s57 = sphi 0, %s41
      %s65 = sphi 0, %s67
      %s68 = sphi 0, %s65
      %s69 = sphi 0, %s68
      %s85 = sphi 0, %s69
    $region4: #{tpu_custom_call.1} parent=1 // loop_header_branch
      %16 = sbr.rel (%p14) target = $region8
    $region5: #{tpu_custom_call.1} parent=1 // loop_body
      %s18 = ssub.s32 %s13, 1
      %s19 = ssub.s32 %s13, 2
      %s26 = sadd.s32 1, %s21
      %p27 = scmp.ge.s32.totalorder %s26, 1
      %s28 = scalar_select %p27, 0, %s26
      %s29 = sadd.s32 1, %s20
      %s30 = scalar_select %p27, %s29, %s20
      %p31 = scmp.ge.s32.totalorder %s30, 2
      %s32 = scalar_select %p31, 0, %s30
      %s33 = ssub.s32 %s20, %s32
      %s34 = ssub.s32 %s21, %s28
      %s35 = sor.u32 %s33, %s34
      %p36 = scmp.eq.s32.totalorder %s35, 0
      %s38 = sadd.s32 %s37, 1
      %s39 = scalar_select %p36, %s37, %s38
      %p42 = pneg %p36
      %p43 = scmp.eq.s32.totalorder %s13, 1
      %p44 = por %p42, %p43
      %p45 = scmp.ne.s32.totalorder %s37, %s40
      %p46 = scmp.eq.s32.totalorder %s13, 0
      %p47 = por %p45, %p46
      %p48 = scmp.ne.s32.totalorder %s37, %s40
      %p49 = scmp.eq.s32.totalorder %s18, 1
      %p50 = por %p48, %p49
      %p51 = scmp.ne.s32.totalorder %s40, %s41
      %p52 = scmp.eq.s32.totalorder %s18, 0
      %p53 = por %p51, %p52
      %p54 = scmp.ne.s32.totalorder %s40, %s41
      %p55 = scmp.eq.s32.totalorder %s19, 1
      %p56 = por %p54, %p55
      %p58 = scmp.ne.s32.totalorder %s41, %s57
      %p59 = scmp.eq.s32.totalorder %s19, 0
      %p60 = por %p58, %p59
      %s61 = ssub.s32 %s20, %s32
      %s62 = ssub.s32 %s21, %s28
      %s63 = sor.u32 %s61, %s62
      %p64 = scmp.eq.s32.totalorder %s63, 0
      %s66 = sadd.s32 %s65, 1
      %s67 = scalar_select %p64, %s65, %s66
      %p70 = pneg %p64
      %p71 = scmp.eq.s32.totalorder %s13, 1
      %p72 = por %p70, %p71
      %p73 = scmp.ne.s32.totalorder %s65, %s68
      %p74 = scmp.eq.s32.totalorder %s13, 0
      %p75 = por %p73, %p74
      %p76 = scmp.ne.s32.totalorder %s65, %s68
      %p77 = scmp.eq.s32.totalorder %s18, 1
      %p78 = por %p76, %p77
      %p79 = scmp.ne.s32.totalorder %s68, %s69
      %p80 = scmp.eq.s32.totalorder %s18, 0
      %p81 = por %p79, %p80
      %p82 = scmp.ne.s32.totalorder %s68, %s69
      %p83 = scmp.eq.s32.totalorder %s19, 1
      %p84 = por %p82, %p83
      %p86 = scmp.ne.s32.totalorder %s69, %s85
      %p87 = scmp.eq.s32.totalorder %s19, 0
      %p88 = por %p86, %p87
      %p89 = scmp.le.s32.totalorder 1, %s13
      %p90 = scmp.lt.s32.totalorder %s13, 3
      %p91 = pnand %p89, %p90
      %p92 = pneg %p91
      // Predicated region
      $region9: #{tpu_custom_call.1} parent=5 // pred_check
        _
      $region10: #{tpu_custom_call.1} parent=5 // pred_check_branch
        %94 = sbr.rel (%p91) target = $region12
      $region11: #{tpu_custom_call.1} parent=5 // pred_region
        %s95 = ssub.s32 %s13, 1
      $region12: #{tpu_custom_call.1} parent=5 // pred_fallthru
        _
      %p96 = scmp.lt.s32.totalorder %s13, 2
      // Predicated region
      $region13: #{tpu_custom_call.1} parent=5 // pred_check
        %p97 = pneg %p96
      $region14: #{tpu_custom_call.1} parent=5 // pred_check_branch
        %99 = sbr.rel (%p97) target = $region16
      $region15: #{tpu_custom_call.1} parent=5 // pred_region
        // Predicated region
        $region17: #{tpu_custom_call.1} parent=15 // pred_check
          %p100 = pneg %p47
        $region18: #{tpu_custom_call.1} parent=15 // pred_check_branch
          %102 = sbr.rel (%p100) target = $region20
        $region19: #{tpu_custom_call.1} parent=15 // pred_region
          %s103 = sand.u32 %s37, 1
          %s104 = scalar_lea.sflag [#allocation3], %s103
          %s105 = sand.u32 %s37, 1
          %s106 = smul.addr %s105, 6
          %s107 = scalar_lea.vmem [#allocation2], %s106
          %s109 = ssub.s32 96, 96
          %110 = vsyncadd %s104, %s109
          %s111 = smul.addr %s20, 3
          %s112 = sadd.s32 %s21, %s111
          %s113 = smul.addr %s112, 32
          %s114 = scalar_lea.hbm %s0, %s113
          %s115 = sshll.u32 %s107, 4
          %s116 = int_to_ptr.vmem [resolvable:$true] %s115
          %121 = dma.hbm_to_vmem [thread:$0]  %s114, 96, %s116, %s104, 32, 32, 2
        $region20: #{tpu_custom_call.1} parent=15 // pred_fallthru
          _
      $region16: #{tpu_custom_call.1} parent=5 // pred_fallthru
        _
      %p122 = scmp.le.s32.totalorder 1, %s13
      %p123 = scmp.lt.s32.totalorder %s13, 3
      %p124 = pnand %p122, %p123
      %p125 = pneg %p124
      // Predicated region
      $region21: #{tpu_custom_call.1} parent=5 // pred_check
        _
      $region22: #{tpu_custom_call.1} parent=5 // pred_check_branch
        %127 = sbr.rel (%p124) target = $region24
      $region23: #{tpu_custom_call.1} parent=5 // pred_region
        %s128 = ssub.s32 %s13, 1
        %s129 = sand.u32 %s40, 1
        %s130 = scalar_lea.sflag [#allocation3], %s129
        %s131 = sand.u32 %s40, 1
        %s132 = smul.addr %s131, 6
        %s133 = scalar_lea.vmem [#allocation2], %s132
        // Predicated region
        $region25: #{tpu_custom_call.1} parent=23 // pred_check
          %p134 = pneg %p53
        $region26: #{tpu_custom_call.1} parent=23 // pred_check_branch
          %136 = sbr.rel (%p134) target = $region28
        $region27: #{tpu_custom_call.1} parent=23 // pred_region
          %137 = dma.done %s130, 96
        $region28: #{tpu_custom_call.1} parent=23 // pred_fallthru
          _
        %s138 = sand.u32 %s40, 1
        %s139 = scalar_lea.sflag [#allocation3], %s138
        %s140 = sand.u32 %s40, 1
        %s141 = smul.addr %s140, 6
        %s142 = scalar_lea.vmem [#allocation2], %s141
        %p143 = pneg %p53
        %p144 = pneg %p50
        %p145 = pneg %p81
        %p146 = pneg %p78
        %s147 = sand.u32 %s68, 1
        %s148 = scalar_lea.sflag [#allocation4], %s147
        %s149 = sand.u32 %s68, 1
        %s150 = smul.addr %s149, 6
        %s151 = scalar_lea.vmem [#allocation5], %s150
        %v152 = vld [vmem:[%s133] sm:$0x3]
        %s153 = scalar_lea.vmem %s133, 2 [#allocation2]
        %v154 = vld [vmem:[%s153] sm:$0x3]
        %v155 = vsub.f32 %v154, 0.5
        %s156 = scalar_lea.vmem %s133, 4 [#allocation2]
        %v157 = vld [vmem:[%s156] sm:$0x3]
        %v158 = vsub.f32 %v157, 0.5
        %v159 = vmul.f32 %v158, 1.403
        %v160 = vadd.f32 %v152, %v159
        %161 = vst [vmem:[%s151] sm:$0x3] %v160
        %v162 = vmul.f32 %v158, 0.714
        %v163 = vsub.f32 %v152, %v162
        %v164 = vmul.f32 %v155, 0.344
        %v165 = vsub.f32 %v163, %v164
        %s166 = scalar_lea.vmem %s151, 2 [#allocation5]
        %167 = vst [vmem:[%s166] sm:$0x3] %v165
        %v168 = vmul.f32 %v155, 1.773
        %v169 = vadd.f32 %v152, %v168
        %s170 = scalar_lea.vmem %s151, 4 [#allocation5]
        %171 = vst [vmem:[%s170] sm:$0x3] %v169
        %s172 = sand.u32 %s68, 1
        %s173 = scalar_lea.sflag [#allocation4], %s172
        %s174 = sand.u32 %s68, 1
        %s175 = smul.addr %s174, 6
        %s176 = scalar_lea.vmem [#allocation5], %s175
        // Predicated region
        $region29: #{tpu_custom_call.1} parent=23 // pred_check
          %p177 = pneg %p78
        $region30: #{tpu_custom_call.1} parent=23 // pred_check_branch
          %179 = sbr.rel (%p177) target = $region32
        $region31: #{tpu_custom_call.1} parent=23 // pred_region
          %s181 = ssub.s32 96, 96
          %182 = vsyncadd %s173, %s181
          %s183 = smul.addr %s22, 3
          %s184 = sadd.s32 %s23, %s183
          %s185 = smul.addr %s184, 32
          %s186 = scalar_lea.hbm %s1, %s185
          %s187 = sshll.u32 %s176, 4
          %s188 = int_to_ptr.vmem [resolvable:$true] %s187
          %193 = dma.vmem_to_hbm [thread:$0]  %s188, 96, %s186, %s173, 32, 32, 2
        $region32: #{tpu_custom_call.1} parent=23 // pred_fallthru
          _
      $region24: #{tpu_custom_call.1} parent=5 // pred_fallthru
        _
      %p194 = scmp.le.s32.totalorder 2, %s13
      // Predicated region
      $region33: #{tpu_custom_call.1} parent=5 // pred_check
        %p195 = pneg %p194
      $region34: #{tpu_custom_call.1} parent=5 // pred_check_branch
        %197 = sbr.rel (%p195) target = $region36
      $region35: #{tpu_custom_call.1} parent=5 // pred_region
        %s198 = ssub.s32 %s13, 2
        // Predicated region
        $region37: #{tpu_custom_call.1} parent=35 // pred_check
          %p199 = pneg %p84
        $region38: #{tpu_custom_call.1} parent=35 // pred_check_branch
          %201 = sbr.rel (%p199) target = $region40
        $region39: #{tpu_custom_call.1} parent=35 // pred_region
          %s202 = sand.u32 %s69, 1
          %s203 = scalar_lea.sflag [#allocation4], %s202
          %s204 = sand.u32 %s69, 1
          %s205 = smul.addr %s204, 6
          %s206 = scalar_lea.vmem [#allocation5], %s205
          %207 = dma.done %s203, 96
        $region40: #{tpu_custom_call.1} parent=35 // pred_fallthru
          _
      $region36: #{tpu_custom_call.1} parent=5 // pred_fallthru
        _
    $region6: #{tpu_custom_call.1} parent=1 // loop_footer
      %s17 = sadd.s32 1, %s13
    $region7: #{tpu_custom_call.1} parent=1 // loop_footer_branch
      %12 = sbr.rel target = $region3
    $region8: #{tpu_custom_call.1} parent=1 // loop_exit
      _
    %208 = vsyncpa [#allocation3], 1
    %s209 = scalar_lea.sflag [#allocation3], 1
    %210 = vsyncpa %s209, 1
    %211 = vsyncpa [#allocation4], 1
    %s212 = scalar_lea.sflag [#allocation4], 1
    %213 = vsyncpa %s212, 1

</llo_original>
